<compile_context>
chip_gen: v7x
topology: tpu7x:2x2x1
jax: 0.10.0
libtpu: 0.0.40
codegen_flags: <defaults>
</compile_context>

<pallas_src>
import math

import jax
import jax.numpy as jnp
from jax.experimental import pallas as pl
from jax.experimental.pallas import tpu as pltpu

_LANE = 128
_SUBLANE = 8


def _round_up(x, m):
    return ((x + m - 1) // m) * m


def _mlp_classifier_kernel(x_ref, w1_ref, b1_ref, w2_ref, b2_ref, o_ref):
    # x_ref:  [TM, H]       w1_ref: [H, MID]     b1_ref: [1, MID]
    # w2_ref: [MID, L_pad]  b2_ref: [1, L_pad]   o_ref:  [TM, L_pad]
    h = jnp.dot(x_ref[...], w1_ref[...], preferred_element_type=jnp.float32)
    h = jnp.maximum(h + b1_ref[...].astype(jnp.float32), 0.0)  # bias + ReLU in f32
    # dropout (eval mode) == identity
    out = jnp.dot(h.astype(w2_ref.dtype), w2_ref[...],
                  preferred_element_type=jnp.float32)
    o_ref[...] = (out + b2_ref[...].astype(jnp.float32)).astype(o_ref.dtype)


def multi_nonlinear_classifier(x, w1, b1, w2, b2, *, tm=1024):
    """Fused forward pass of MultiNonLinearClassifier (eval mode).

    x : [..., hidden]  (any leading dims)
    w1: [hidden, hidden//2], b1: [hidden//2]
    w2: [hidden//2, num_label], b2: [num_label]
    returns [..., num_label]
    """
    hidden = x.shape[-1]
    mid = w1.shape[-1]
    num_label = w2.shape[-1]
    lead = x.shape[:-1]
    m = math.prod(lead) if lead else 1

    x2d = x.reshape(m, hidden)
    b1_2d = b1.reshape(1, mid)

    # --- lane-dense output: pad num_label up to a multiple of 128 ------------
    l_pad = _round_up(max(num_label, 1), _LANE)
    w2_p = jnp.pad(w2, ((0, 0), (0, l_pad - num_label)))
    b2_p = jnp.pad(b2.reshape(1, num_label), ((0, 0), (0, l_pad - num_label)))

    # --- row tiling: large tiles, padded M -----------------------------------
    tm_eff = min(tm, _round_up(m, _SUBLANE))
    tm_eff = _round_up(tm_eff, _SUBLANE)
    m_pad = _round_up(m, tm_eff)
    if m_pad != m:
        x2d = jnp.pad(x2d, ((0, m_pad - m), (0, 0)))
    grid = (m_pad // tm_eff,)

    dsize = jnp.dtype(x.dtype).itemsize
    wsize = jnp.dtype(w1.dtype).itemsize
    cost = pl.CostEstimate(
        flops=2 * m_pad * hidden * mid + 2 * m_pad * mid * l_pad,
        transcendentals=0,
        bytes_accessed=(m_pad * hidden * dsize            # x in
                        + (hidden * mid + mid + mid * l_pad + l_pad) * wsize
                        + m_pad * l_pad * dsize),          # out
    )

    out = pl.pallas_call(
        _mlp_classifier_kernel,
        out_shape=jax.ShapeDtypeStruct((m_pad, l_pad), x.dtype),
        grid=grid,
        in_specs=[
            pl.BlockSpec((tm_eff, hidden), lambda i: (i, 0)),   # x: streamed
            pl.BlockSpec((hidden, mid), lambda i: (0, 0)),      # w1: resident
            pl.BlockSpec((1, mid), lambda i: (0, 0)),           # b1: resident
            pl.BlockSpec((mid, l_pad), lambda i: (0, 0)),       # w2: resident
            pl.BlockSpec((1, l_pad), lambda i: (0, 0)),         # b2: resident
        ],
        out_specs=pl.BlockSpec((tm_eff, l_pad), lambda i: (i, 0)),
        compiler_params=pltpu.CompilerParams(
            dimension_semantics=("parallel",)),
        cost_estimate=cost,
    )(x2d, w1, b1_2d, w2_p, b2_p)

    # drop padded rows / padded label columns, restore leading dims
    out = out[:m, :num_label]
    return out.reshape(*lead, num_label)


def _reference(x, w1, b1, w2, b2):
    h = jnp.maximum(x @ w1 + b1, 0.0)
    return h @ w2 + b2


if __name__ == "__main__":
    # Shapes consistent with the module: hidden=128, num_label=8,
    # input_features of shape (batch=2, seq=8, hidden=128).
    hidden = 128
    mid = hidden // 2
    num_label = 8
    batch, seq = 2, 8

    key = jax.random.PRNGKey(0)
    kx, kw1, kb1, kw2, kb2, kx2 = jax.random.split(key, 6)

    # Deterministic parameter init (analogous to nn.Linear's fan-in scaling).
    w1 = jax.random.uniform(kw1, (hidden, mid), jnp.float32,
                            minval=-1.0, maxval=1.0) / jnp.sqrt(hidden)
    b1 = jax.random.uniform(kb1, (mid,), jnp.float32,
                            minval=-1.0, maxval=1.0) / jnp.sqrt(hidden)
    w2 = jax.random.uniform(kw2, (mid, num_label), jnp.float32,
                            minval=-1.0, maxval=1.0) / jnp.sqrt(mid)
    b2 = jax.random.uniform(kb2, (num_label,), jnp.float32,
                            minval=-1.0, maxval=1.0) / jnp.sqrt(mid)

    # --- case 1: small (batch, seq, hidden) input, single grid step ----------
    x = jax.random.normal(kx, (batch, seq, hidden), dtype=jnp.float32)
    out = multi_nonlinear_classifier(x, w1, b1, w2, b2)
    out = jax.block_until_ready(out)
    ref = _reference(x, w1, b1, w2, b2)
    assert out.shape == (batch, seq, num_label), out.shape
    assert jnp.allclose(out, ref, atol=1e-4, rtol=1e-4), "mismatch vs reference (case 1)"

    # --- case 2: exercises the M grid + row padding (M=210, TM=64 -> grid=4) -
    x2 = jax.random.normal(kx2, (3, 70, hidden), dtype=jnp.float32)
    out2 = multi_nonlinear_classifier(x2, w1, b1, w2, b2, tm=64)
    out2 = jax.block_until_ready(out2)
    ref2 = _reference(x2, w1, b1, w2, b2)
    assert out2.shape == (3, 70, num_label), out2.shape
    assert jnp.allclose(out2, ref2, atol=1e-4, rtol=1e-4), "mismatch vs reference (case 2)"

    print("KERNEL_OK")
</pallas_src>

<mosaic_0001>
module attributes {stable_mosaic.version = 11 : i64} {
  func.func @_mlp_classifier_kernel(%arg0: i32, %arg1: memref<16x128xf32, #tpu.memory_space<vmem>>, %arg2: memref<128x64xf32, #tpu.memory_space<vmem>>, %arg3: memref<1x64xf32, #tpu.memory_space<vmem>>, %arg4: memref<64x128xf32, #tpu.memory_space<vmem>>, %arg5: memref<1x128xf32, #tpu.memory_space<vmem>>, %arg6: memref<16x128xf32, #tpu.memory_space<vmem>>) attributes {dimension_semantics = [#tpu.dimension_semantics<parallel>], iteration_bounds = array<i64: 1>, scalar_prefetch = 0 : i64, scratch_operands = 0 : i64, tpu.core_type = #tpu.core_type<tc>, window_params = [{transform_indices = @transform_0, window_bounds = array<i64: 16, 128>}, {pipeline_mode = #tpu.pipeline_mode<synchronous>, transform_indices = @transform_1, window_bounds = array<i64: 128, 64>}, {pipeline_mode = #tpu.pipeline_mode<synchronous>, transform_indices = @transform_2, window_bounds = array<i64: 1, 64>}, {pipeline_mode = #tpu.pipeline_mode<synchronous>, transform_indices = @transform_3, window_bounds = array<i64: 64, 128>}, {pipeline_mode = #tpu.pipeline_mode<synchronous>, transform_indices = @transform_4, window_bounds = array<i64: 1, 128>}, {transform_indices = @transform_5, window_bounds = array<i64: 16, 128>}]} {
    %c0 = arith.constant 0 : index
    %c0_0 = arith.constant 0 : index
    %0 = vector.load %arg1[%c0, %c0_0] : memref<16x128xf32, #tpu.memory_space<vmem>>, vector<16x128xf32>
    %c0_1 = arith.constant 0 : index
    %c0_2 = arith.constant 0 : index
    %1 = vector.load %arg2[%c0_1, %c0_2] : memref<128x64xf32, #tpu.memory_space<vmem>>, vector<128x64xf32>
    %cst = arith.constant dense<0.000000e+00> : vector<16x64xf32>
    %2 = tpu.matmul %0, %1, %cst {dimension_numbers = #tpu.dot_dimension_numbers<[1], [0], [0], [1], [0, 0, 1, 1], [], []>} : vector<16x128xf32>, vector<128x64xf32>, vector<16x64xf32> -> vector<16x64xf32>
    %c0_3 = arith.constant 0 : index
    %c0_4 = arith.constant 0 : index
    %3 = vector.load %arg3[%c0_3, %c0_4] : memref<1x64xf32, #tpu.memory_space<vmem>>, vector<1x64xf32>
    %4 = vector.broadcast %3 : vector<1x64xf32> to vector<16x64xf32>
    %5 = arith.addf %2, %4 : vector<16x64xf32>
    %cst_5 = arith.constant 0.000000e+00 : f32
    %6 = vector.broadcast %cst_5 : f32 to vector<16x64xf32>
    %7 = arith.maximumf %5, %6 : vector<16x64xf32>
    %c0_6 = arith.constant 0 : index
    %c0_7 = arith.constant 0 : index
    %8 = vector.load %arg4[%c0_6, %c0_7] : memref<64x128xf32, #tpu.memory_space<vmem>>, vector<64x128xf32>
    %cst_8 = arith.constant dense<0.000000e+00> : vector<16x128xf32>
    %9 = tpu.matmul %7, %8, %cst_8 {dimension_numbers = #tpu.dot_dimension_numbers<[1], [0], [0], [1], [0, 0, 1, 1], [], []>} : vector<16x64xf32>, vector<64x128xf32>, vector<16x128xf32> -> vector<16x128xf32>
    %c0_9 = arith.constant 0 : index
    %c0_10 = arith.constant 0 : index
    %10 = vector.load %arg5[%c0_9, %c0_10] : memref<1x128xf32, #tpu.memory_space<vmem>>, vector<1x128xf32>
    %11 = vector.broadcast %10 : vector<1x128xf32> to vector<16x128xf32>
    %12 = arith.addf %9, %11 : vector<16x128xf32>
    %c0_11 = arith.constant 0 : index
    %c0_12 = arith.constant 0 : index
    %13 = vector.load %arg6[%c0_11, %c0_12] : memref<16x128xf32, #tpu.memory_space<vmem>>, vector<16x128xf32>
    tpu.vector_store %arg6[%c0_11, %c0_12], %12 {strides = array<i32>} : memref<16x128xf32, #tpu.memory_space<vmem>>, vector<16x128xf32>,
    return
  }
  func.func @transform_0(%arg0: i32) -> (i32, i32) {
    %c0_i32 = arith.constant 0 : i32
    %c0_i32_0 = arith.constant 0 : i32
    return %arg0, %c0_i32 : i32, i32
  }
  func.func @transform_1(%arg0: i32) -> (i32, i32) {
    %c0_i32 = arith.constant 0 : i32
    %c0_i32_0 = arith.constant 0 : i32
    %c0_i32_1 = arith.constant 0 : i32
    return %c0_i32, %c0_i32_0 : i32, i32
  }
  func.func @transform_2(%arg0: i32) -> (i32, i32) {
    %c0_i32 = arith.constant 0 : i32
    %c0_i32_0 = arith.constant 0 : i32
    %c0_i32_1 = arith.constant 0 : i32
    return %c0_i32, %c0_i32_0 : i32, i32
  }
  func.func @transform_3(%arg0: i32) -> (i32, i32) {
    %c0_i32 = arith.constant 0 : i32
    %c0_i32_0 = arith.constant 0 : i32
    %c0_i32_1 = arith.constant 0 : i32
    return %c0_i32, %c0_i32_0 : i32, i32
  }
  func.func @transform_4(%arg0: i32) -> (i32, i32) {
    %c0_i32 = arith.constant 0 : i32
    %c0_i32_0 = arith.constant 0 : i32
    %c0_i32_1 = arith.constant 0 : i32
    return %c0_i32, %c0_i32_0 : i32, i32
  }
  func.func @transform_5(%arg0: i32) -> (i32, i32) {
    %c0_i32 = arith.constant 0 : i32
    %c0_i32_0 = arith.constant 0 : i32
    return %arg0, %c0_i32 : i32, i32
  }
}

</mosaic_0001>

<llo_original>
// kernel: tpu_custom_call.1
$region0: #{tpu_custom_call.1}
  #allocation0 [shape = 'u32[]', space=smem, size = 0x4, offset = 0x4, fixed_abs, tag = 'smem constant byte address 0x4 - core index']
  #allocation1 [shape = 'u32[144,128]{1,0:T(1,128)}', space=vmem, size = 0x12000, scoped, tag = 'internal scratch']
  %s0 = inlined_call_operand.vmem [shape: f32[16,128], index: 0, kind: input, shape index: {}]
  %s1 = inlined_call_operand.vmem [shape: f32[128,64], index: 1, kind: input, shape index: {}]
  %s2 = inlined_call_operand.vmem [shape: f32[1,64], index: 2, kind: input, shape index: {}]
  %s3 = inlined_call_operand.vmem [shape: f32[64,128], index: 3, kind: input, shape index: {}]
  %s4 = inlined_call_operand.vmem [shape: f32[1,128], index: 4, kind: input, shape index: {}]
  %s5 = inlined_call_operand.hbm [shape: f32[16,128], index: 5, kind: output, shape index: {}]
  %s6 = sld [smem:[#allocation0]]
  $region30: #{tpu_custom_call.1} parent=0
    _
  %s8 = ssub.s32 1, %s6
  %s9 = scalar_select 0, %s8, %s6
  $region1: #{tpu_custom_call.1} parent=0
    #allocation2 [shape = 'u8[8192]{0}', space=vmem, size = 0x2000, scoped, tag = 'output window, operand 0, single buffered']
    #allocation3 [shape = 's32[1]{0}', space=sflag, size = 0x4, scoped, tag = 'scoped memory for tpu_custom_call.1']
    %10 = vsyncpa [#allocation3], 0
    // Predicated region
    $region2: #{tpu_custom_call.1} parent=1 // pred_check
      _
    $region3: #{tpu_custom_call.1} parent=1 // pred_check_branch
      %12 = sbr.rel (0) target = $region5
    $region4: #{tpu_custom_call.1} parent=1 // pred_region
      _
    $region5: #{tpu_custom_call.1} parent=1 // pred_fallthru
      _
    // Predicated region
    $region6: #{tpu_custom_call.1} parent=1 // pred_check
      _
    $region7: #{tpu_custom_call.1} parent=1 // pred_check_branch
      %14 = sbr.rel (0) target = $region9
    $region8: #{tpu_custom_call.1} parent=1 // pred_region
      _
    $region9: #{tpu_custom_call.1} parent=1 // pred_fallthru
      _
    // Predicated region
    $region10: #{tpu_custom_call.1} parent=1 // pred_check
      _
    $region11: #{tpu_custom_call.1} parent=1 // pred_check_branch
      %16 = sbr.rel (0) target = $region13
    $region12: #{tpu_custom_call.1} parent=1 // pred_region
      _
    $region13: #{tpu_custom_call.1} parent=1 // pred_fallthru
      _
    // Predicated region
    $region14: #{tpu_custom_call.1} parent=1 // pred_check
      _
    $region15: #{tpu_custom_call.1} parent=1 // pred_check_branch
      %18 = sbr.rel (0) target = $region17
    $region16: #{tpu_custom_call.1} parent=1 // pred_region
      _
    $region17: #{tpu_custom_call.1} parent=1 // pred_fallthru
      _
    // Predicated region
    $region18: #{tpu_custom_call.1} parent=1 // pred_check
      _
    $region19: #{tpu_custom_call.1} parent=1 // pred_check_branch
      %20 = sbr.rel (0) target = $region21
    $region20: #{tpu_custom_call.1} parent=1 // pred_region
      _
    $region21: #{tpu_custom_call.1} parent=1 // pred_fallthru
      _
    %v21 = vld [vmem:[%s0] sm:$0xff]
    %v22 = vld [vmem:[%s0 + $0x8] sm:$0xff]
    %v23 = vld [vmem:[%s1] sm:$0xff]
    %v24 = vld [vmem:[%s1 + $0x8] sm:$0xff]
    %v25 = vld [vmem:[%s1 + $0x10] sm:$0xff]
    %v26 = vld [vmem:[%s1 + $0x18] sm:$0xff]
    %v27 = vld [vmem:[%s1 + $0x20] sm:$0xff]
    %v28 = vld [vmem:[%s1 + $0x28] sm:$0xff]
    %v29 = vld [vmem:[%s1 + $0x30] sm:$0xff]
    %v30 = vld [vmem:[%s1 + $0x38] sm:$0xff]
    %v31 = vld [vmem:[%s1 + $0x40] sm:$0xff]
    %v32 = vld [vmem:[%s1 + $0x48] sm:$0xff]
    %v33 = vld [vmem:[%s1 + $0x50] sm:$0xff]
    %v34 = vld [vmem:[%s1 + $0x58] sm:$0xff]
    %v35 = vld [vmem:[%s1 + $0x60] sm:$0xff]
    %v36 = vld [vmem:[%s1 + $0x68] sm:$0xff]
    %v37 = vld [vmem:[%s1 + $0x70] sm:$0xff]
    %v38 = vld [vmem:[%s1 + $0x78] sm:$0xff]
    %v39 = vld [vmem:[%s2] sm:$0x1]
    %v41 = vlaneseq
    %v42 = vshrl.u32 %v41, 7
    %v43 = vsub.s32 0, %v42
    %v44 = vrot.slane %v39, %v43
    %46 = vmatprep.subr.mxu0 0.0
    %47 = vmatpush1.msra.mxu0 %v23
    %48 = vmatprep.subr.mxu0 0.0
    %49 = vmatpush1.msra.mxu0 %v24
    %50 = vmatprep.subr.mxu0 0.0
    %51 = vmatpush1.msra.mxu0 %v25
    %52 = vmatprep.subr.mxu0 0.0
    %53 = vmatpush1.msra.mxu0 %v26
    %54 = vmatprep.subr.mxu0 0.0
    %55 = vmatpush1.msra.mxu0 %v27
    %56 = vmatprep.subr.mxu0 0.0
    %57 = vmatpush1.msra.mxu0 %v28
    %58 = vmatprep.subr.mxu0 0.0
    %59 = vmatpush1.msra.mxu0 %v29
    %60 = vmatprep.subr.mxu0 0.0
    %61 = vmatpush1.msra.mxu0 %v30
    %62 = vmatprep.subr.mxu0 0.0
    %63 = vmatpush1.msra.mxu0 %v31
    %64 = vmatprep.subr.mxu0 0.0
    %65 = vmatpush1.msra.mxu0 %v32
    %66 = vmatprep.subr.mxu0 0.0
    %67 = vmatpush1.msra.mxu0 %v33
    %68 = vmatprep.subr.mxu0 0.0
    %69 = vmatpush1.msra.mxu0 %v34
    %70 = vmatprep.subr.mxu0 0.0
    %71 = vmatpush1.msra.mxu0 %v35
    %72 = vmatprep.subr.mxu0 0.0
    %73 = vmatpush1.msra.mxu0 %v36
    %74 = vmatprep.subr.mxu0 0.0
    %75 = vmatpush1.msra.mxu0 %v37
    %76 = vmatprep.subr.mxu0 0.0
    %77 = vmatpush1.msra.mxu0 %v38
    %78 = vmatprep.subr.mxu0 0.0
    %79 = vmatpush1.msra.mxu0 0.0
    %80 = vmatprep.subr.mxu0 0.0
    %81 = vmatpush1.msra.mxu0 0.0
    %82 = vmatprep.subr.mxu0 0.0
    %83 = vmatpush1.msra.mxu0 0.0
    %84 = vmatprep.subr.mxu0 0.0
    %85 = vmatpush1.msra.mxu0 0.0
    %86 = vmatprep.subr.mxu0 0.0
    %87 = vmatpush1.msra.mxu0 0.0
    %88 = vmatprep.subr.mxu0 0.0
    %89 = vmatpush1.msra.mxu0 0.0
    %90 = vmatprep.subr.mxu0 0.0
    %91 = vmatpush1.msra.mxu0 0.0
    %92 = vmatprep.subr.mxu0 0.0
    %93 = vmatpush1.msra.mxu0 0.0
    %94 = vmatprep.subr.mxu0 0.0
    %95 = vmatpush1.msra.mxu0 0.0
    %96 = vmatprep.subr.mxu0 0.0
    %97 = vmatpush1.msra.mxu0 0.0
    %98 = vmatprep.subr.mxu0 0.0
    %99 = vmatpush1.msra.mxu0 0.0
    %100 = vmatprep.subr.mxu0 0.0
    %101 = vmatpush1.msra.mxu0 0.0
    %102 = vmatprep.subr.mxu0 0.0
    %103 = vmatpush1.msra.mxu0 0.0
    %104 = vmatprep.subr.mxu0 0.0
    %105 = vmatpush1.msra.mxu0 0.0
    %106 = vmatprep.subr.mxu0 0.0
    %107 = vmatpush1.msra.mxu0 0.0
    %108 = vmatprep.subr.mxu0 0.0
    %109 = vmatpush1.msra.mxu0 0.0
    %110 = vmatprep.mubr.f32.mxu0 0.0
    %111 = vmatmul.mubr.f32.gmra.mrb[0].mxu0 %v21
    %v112 = vpop.f32.mrb[0].mxu0
    %v113 = vadd.f32 %v44, %v112
    %v114 = vpop.f32.mrb[0].mxu0
    %115 = vmatprep.mubr.f32.mxu0 0.0
    %116 = vmatmul.mubr.f32.gmra.mrb[0].mxu0 %v22
    %v117 = vpop.f32.mrb[0].mxu0
    %v118 = vadd.f32 %v44, %v117
    %v119 = vpop.f32.mrb[0].mxu0
    %120 = vdwg.mxu0
    %v121 = vmax.f32 %v113, 0.0
    %v122 = vmax.f32 %v118, 0.0
    %v123 = vld [vmem:[%s3] sm:$0xff]
    %v124 = vld [vmem:[%s3 + $0x8] sm:$0xff]
    %v125 = vld [vmem:[%s3 + $0x10] sm:$0xff]
    %v126 = vld [vmem:[%s3 + $0x18] sm:$0xff]
    %v127 = vld [vmem:[%s3 + $0x20] sm:$0xff]
    %v128 = vld [vmem:[%s3 + $0x28] sm:$0xff]
    %v129 = vld [vmem:[%s3 + $0x30] sm:$0xff]
    %v130 = vld [vmem:[%s3 + $0x38] sm:$0xff]
    %v131 = vld [vmem:[%s4] sm:$0x1]
    %v133 = vlaneseq
    %v134 = vshrl.u32 %v133, 7
    %v135 = vsub.s32 0, %v134
    %v136 = vrot.slane %v131, %v135
    %vm138 = vcmask 523264
    %v140 = vsel %vm138, %v121, 0
    %v143 = vsel %vm138, %v122, 0
    %145 = vmatprep.subr.mxu0 0.0
    %146 = vmatpush1.msra.mxu0 %v123
    %147 = vmatprep.subr.mxu0 0.0
    %148 = vmatpush1.msra.mxu0 %v124
    %149 = vmatprep.subr.mxu0 0.0
    %150 = vmatpush1.msra.mxu0 %v125
    %151 = vmatprep.subr.mxu0 0.0
    %152 = vmatpush1.msra.mxu0 %v126
    %153 = vmatprep.subr.mxu0 0.0
    %154 = vmatpush1.msra.mxu0 %v127
    %155 = vmatprep.subr.mxu0 0.0
    %156 = vmatpush1.msra.mxu0 %v128
    %157 = vmatprep.subr.mxu0 0.0
    %158 = vmatpush1.msra.mxu0 %v129
    %159 = vmatprep.subr.mxu0 0.0
    %160 = vmatpush1.msra.mxu0 %v130
    %161 = vmatprep.subr.mxu0 0.0
    %162 = vmatpush1.msra.mxu0 0.0
    %163 = vmatprep.subr.mxu0 0.0
    %164 = vmatpush1.msra.mxu0 0.0
    %165 = vmatprep.subr.mxu0 0.0
    %166 = vmatpush1.msra.mxu0 0.0
    %167 = vmatprep.subr.mxu0 0.0
    %168 = vmatpush1.msra.mxu0 0.0
    %169 = vmatprep.subr.mxu0 0.0
    %170 = vmatpush1.msra.mxu0 0.0
    %171 = vmatprep.subr.mxu0 0.0
    %172 = vmatpush1.msra.mxu0 0.0
    %173 = vmatprep.subr.mxu0 0.0
    %174 = vmatpush1.msra.mxu0 0.0
    %175 = vmatprep.subr.mxu0 0.0
    %176 = vmatpush1.msra.mxu0 0.0
    %177 = vmatprep.subr.mxu0 0.0
    %178 = vmatpush1.msra.mxu0 0.0
    %179 = vmatprep.subr.mxu0 0.0
    %180 = vmatpush1.msra.mxu0 0.0
    %181 = vmatprep.subr.mxu0 0.0
    %182 = vmatpush1.msra.mxu0 0.0
    %183 = vmatprep.subr.mxu0 0.0
    %184 = vmatpush1.msra.mxu0 0.0
    %185 = vmatprep.subr.mxu0 0.0
    %186 = vmatpush1.msra.mxu0 0.0
    %187 = vmatprep.subr.mxu0 0.0
    %188 = vmatpush1.msra.mxu0 0.0
    %189 = vmatprep.subr.mxu0 0.0
    %190 = vmatpush1.msra.mxu0 0.0
    %191 = vmatprep.subr.mxu0 0.0
    %192 = vmatpush1.msra.mxu0 0.0
    %193 = vmatprep.subr.mxu0 0.0
    %194 = vmatpush1.msra.mxu0 0.0
    %195 = vmatprep.subr.mxu0 0.0
    %196 = vmatpush1.msra.mxu0 0.0
    %197 = vmatprep.subr.mxu0 0.0
    %198 = vmatpush1.msra.mxu0 0.0
    %199 = vmatprep.subr.mxu0 0.0
    %200 = vmatpush1.msra.mxu0 0.0
    %201 = vmatprep.subr.mxu0 0.0
    %202 = vmatpush1.msra.mxu0 0.0
    %203 = vmatprep.subr.mxu0 0.0
    %204 = vmatpush1.msra.mxu0 0.0
    %205 = vmatprep.subr.mxu0 0.0
    %206 = vmatpush1.msra.mxu0 0.0
    %207 = vmatprep.subr.mxu0 0.0
    %208 = vmatpush1.msra.mxu0 0.0
    %209 = vmatprep.mubr.f32.mxu0 0.0
    %210 = vmatmul.mubr.f32.gmra.mrb[0].mxu0 %v140
    %v211 = vpop.f32.mrb[0].mxu0
    %v212 = vadd.f32 %v136, %v211
    %v213 = vpop.f32.mrb[0].mxu0
    %214 = vmatprep.mubr.f32.mxu0 0.0
    %215 = vmatmul.mubr.f32.gmra.mrb[0].mxu0 %v143
    %v216 = vpop.f32.mrb[0].mxu0
    %v217 = vadd.f32 %v136, %v216
    %v218 = vpop.f32.mrb[0].mxu0
    %219 = vdwg.mxu0
    %220 = vst [vmem:[#allocation2] sm:$0xff] %v212
    %221 = vst [vmem:[#allocation2 + $0x8] sm:$0xff] %v217
    // Predicated region
    $region22: #{tpu_custom_call.1} parent=1 // pred_check
      _
    $region23: #{tpu_custom_call.1} parent=1 // pred_check_branch
      %223 = sbr.rel (0) target = $region25
    $region24: #{tpu_custom_call.1} parent=1 // pred_region
      %s225 = ssub.s32 256, 256
      %226 = vsyncadd [#allocation3], %s225
      %s227 = sshll.u32 [#allocation2], 4
      %s228 = int_to_ptr.vmem [resolvable:$true] %s227
      %233 = dma.vmem_to_hbm [thread:$0]  %s228, 256, %s5, [#allocation3], 128, 128, 8
    $region25: #{tpu_custom_call.1} parent=1 // pred_fallthru
      _
    // Predicated region
    $region26: #{tpu_custom_call.1} parent=1 // pred_check
      _
    $region27: #{tpu_custom_call.1} parent=1 // pred_check_branch
      %235 = sbr.rel (0) target = $region29
    $region28: #{tpu_custom_call.1} parent=1 // pred_region
      %236 = dma.done [#allocation3], 256
    $region29: #{tpu_custom_call.1} parent=1 // pred_fallthru
      _
    %237 = vsyncpa [#allocation3], 1

</llo_original>
